<compile_context>
chip_gen: v6e
topology: v6e:2x2x1
jax: 0.10.0
libtpu: 0.0.40
codegen_flags: <defaults>
</compile_context>

<pallas_src>
import jax
import jax.numpy as jnp
from jax.experimental import pallas as pl
from jax.experimental.pallas import tpu as pltpu

F = 100        # feature dim of every Linear(100, 100)
L = 10         # number of stacked layers
B = 8          # batch size for the example run
FP = 128       # feature dim padded to lane width (128)
SUBLANE = 8    # batch padded to a multiple of 8 sublanes


def _make_mlp_kernel(n_layers):
    def mlp_kernel(x_ref, w_ref, b_ref, o_ref):
        # Running activation stays in vregs; all weights/biases are VMEM-resident.
        act = x_ref[...].astype(jnp.float32)
        for l in range(n_layers):                      # static, fully unrolled
            act = jnp.dot(act, w_ref[l],
                          preferred_element_type=jnp.float32)
            act = act + b_ref[l]                       # (FP,) broadcast bias add
        o_ref[...] = act.astype(o_ref.dtype)
    return mlp_kernel


def simple_module_forward(x, weights, biases):
    """x: (B, F) f32; weights: (L, F, F) (already transposed vs torch); biases: (L, F)."""
    b_dim, f_in = x.shape
    n_layers, _, f_out = weights.shape

    # Pad batch to a multiple of 8 sublanes and features to 128 lanes.
    bp_dim = ((b_dim + SUBLANE - 1) // SUBLANE) * SUBLANE
    xp = jnp.zeros((bp_dim, FP), x.dtype).at[:b_dim, :f_in].set(x)
    wp = jnp.zeros((n_layers, FP, FP), weights.dtype).at[:, :f_in, :f_out].set(weights)
    bb = jnp.zeros((n_layers, FP), biases.dtype).at[:, :f_out].set(biases)

    out_padded = pl.pallas_call(
        _make_mlp_kernel(n_layers),
        out_shape=jax.ShapeDtypeStruct((bp_dim, FP), x.dtype),
        grid_spec=pltpu.PrefetchScalarGridSpec(
            num_scalar_prefetch=0,
            grid=(1,),  # single step: everything resident, no per-layer grid overhead
            in_specs=[
                pl.BlockSpec((bp_dim, FP), lambda i: (0, 0)),            # activation
                pl.BlockSpec((n_layers, FP, FP), lambda i: (0, 0, 0)),   # all weights
                pl.BlockSpec((n_layers, FP), lambda i: (0, 0)),          # all biases
            ],
            out_specs=pl.BlockSpec((bp_dim, FP), lambda i: (0, 0)),
        ),
        compiler_params=pltpu.CompilerParams(
            dimension_semantics=("arbitrary",),
        ),
        cost_estimate=pl.CostEstimate(
            flops=2 * n_layers * bp_dim * FP * FP,
            transcendentals=0,
            bytes_accessed=(bp_dim * FP + n_layers * FP * FP
                            + n_layers * FP + bp_dim * FP) * 4,
        ),
    )(xp, wp, bb)

    # Slice the sublane/lane padding back off.
    return out_padded[:b_dim, :f_out]


def reference_forward(x, weights, biases):
    """Pure-JAX reference of the same 10-layer MLP."""
    y = x
    for l in range(weights.shape[0]):
        y = y @ weights[l] + biases[l]
    return y


if __name__ == "__main__":
    key = jax.random.PRNGKey(0)
    kx, kw, kb = jax.random.split(key, 3)

    # Deterministic parameter init (mimics torch.nn.Linear's uniform(-1/sqrt(F), 1/sqrt(F))).
    bound = 1.0 / jnp.sqrt(jnp.float32(F))
    x = jax.random.normal(kx, (B, F), dtype=jnp.float32)
    weights = jax.random.uniform(kw, (L, F, F), dtype=jnp.float32, minval=-bound, maxval=bound)
    biases = jax.random.uniform(kb, (L, F), dtype=jnp.float32, minval=-bound, maxval=bound)

    out = simple_module_forward(x, weights, biases)
    out = jax.block_until_ready(out)

    ref = reference_forward(x, weights, biases)
    assert out.shape == (B, F)
    assert jnp.allclose(out, ref, atol=1e-4, rtol=1e-4), "Pallas output mismatch vs reference"

    print("KERNEL_OK")
</pallas_src>

<mosaic_0001>
module attributes {stable_mosaic.version = 11 : i64} {
  func.func @mlp_kernel(%arg0: i32, %arg1: memref<8x128xf32, #tpu.memory_space<vmem>>, %arg2: memref<10x128x128xf32, #tpu.memory_space<vmem>>, %arg3: memref<10x128xf32, #tpu.memory_space<vmem>>, %arg4: memref<8x128xf32, #tpu.memory_space<vmem>>) attributes {dimension_semantics = [#tpu.dimension_semantics<arbitrary>], iteration_bounds = array<i64: 1>, scalar_prefetch = 0 : i64, scratch_operands = 0 : i64, tpu.core_type = #tpu.core_type<tc>, window_params = [{pipeline_mode = #tpu.pipeline_mode<synchronous>, transform_indices = @transform_0, window_bounds = array<i64: 8, 128>}, {pipeline_mode = #tpu.pipeline_mode<synchronous>, transform_indices = @transform_1, window_bounds = array<i64: 10, 128, 128>}, {pipeline_mode = #tpu.pipeline_mode<synchronous>, transform_indices = @transform_2, window_bounds = array<i64: 10, 128>}, {pipeline_mode = #tpu.pipeline_mode<synchronous>, transform_indices = @transform_3, window_bounds = array<i64: 8, 128>}]} {
    %c0 = arith.constant 0 : index
    %c0_0 = arith.constant 0 : index
    %0 = vector.load %arg1[%c0, %c0_0] : memref<8x128xf32, #tpu.memory_space<vmem>>, vector<8x128xf32>
    %c0_1 = arith.constant 0 : index
    %c0_2 = arith.constant 0 : index
    %c0_3 = arith.constant 0 : index
    %1 = vector.load %arg2[%c0_1, %c0_2, %c0_3] : memref<10x128x128xf32, #tpu.memory_space<vmem>>, vector<1x128x128xf32>
    %2 = vector.shape_cast %1 : vector<1x128x128xf32> to vector<128x128xf32>
    %cst = arith.constant dense<0.000000e+00> : vector<8x128xf32>
    %3 = tpu.matmul %0, %2, %cst {dimension_numbers = #tpu.dot_dimension_numbers<[1], [0], [0], [1], [0, 0, 1, 1], [], []>} : vector<8x128xf32>, vector<128x128xf32>, vector<8x128xf32> -> vector<8x128xf32>
    %c0_4 = arith.constant 0 : index
    %c0_5 = arith.constant 0 : index
    %4 = vector.load %arg3[%c0_4, %c0_5] : memref<10x128xf32, #tpu.memory_space<vmem>>, vector<1x128xf32>
    %5 = vector.shape_cast %4 : vector<1x128xf32> to vector<128xf32>
    %6 = vector.shape_cast %5 : vector<128xf32> to vector<1x128xf32>
    %7 = vector.broadcast %6 : vector<1x128xf32> to vector<8x128xf32>
    %8 = arith.addf %3, %7 : vector<8x128xf32>
    %c1 = arith.constant 1 : index
    %c0_6 = arith.constant 0 : index
    %c0_7 = arith.constant 0 : index
    %9 = vector.load %arg2[%c1, %c0_6, %c0_7] : memref<10x128x128xf32, #tpu.memory_space<vmem>>, vector<1x128x128xf32>
    %10 = vector.shape_cast %9 : vector<1x128x128xf32> to vector<128x128xf32>
    %cst_8 = arith.constant dense<0.000000e+00> : vector<8x128xf32>
    %11 = tpu.matmul %8, %10, %cst_8 {dimension_numbers = #tpu.dot_dimension_numbers<[1], [0], [0], [1], [0, 0, 1, 1], [], []>} : vector<8x128xf32>, vector<128x128xf32>, vector<8x128xf32> -> vector<8x128xf32>
    %c1_9 = arith.constant 1 : index
    %c0_10 = arith.constant 0 : index
    %12 = vector.load %arg3[%c1_9, %c0_10] : memref<10x128xf32, #tpu.memory_space<vmem>>, vector<1x128xf32>
    %13 = vector.shape_cast %12 : vector<1x128xf32> to vector<128xf32>
    %14 = vector.shape_cast %13 : vector<128xf32> to vector<1x128xf32>
    %15 = vector.broadcast %14 : vector<1x128xf32> to vector<8x128xf32>
    %16 = arith.addf %11, %15 : vector<8x128xf32>
    %c2 = arith.constant 2 : index
    %c0_11 = arith.constant 0 : index
    %c0_12 = arith.constant 0 : index
    %17 = vector.load %arg2[%c2, %c0_11, %c0_12] : memref<10x128x128xf32, #tpu.memory_space<vmem>>, vector<1x128x128xf32>
    %18 = vector.shape_cast %17 : vector<1x128x128xf32> to vector<128x128xf32>
    %cst_13 = arith.constant dense<0.000000e+00> : vector<8x128xf32>
    %19 = tpu.matmul %16, %18, %cst_13 {dimension_numbers = #tpu.dot_dimension_numbers<[1], [0], [0], [1], [0, 0, 1, 1], [], []>} : vector<8x128xf32>, vector<128x128xf32>, vector<8x128xf32> -> vector<8x128xf32>
    %c2_14 = arith.constant 2 : index
    %c0_15 = arith.constant 0 : index
    %20 = vector.load %arg3[%c2_14, %c0_15] : memref<10x128xf32, #tpu.memory_space<vmem>>, vector<1x128xf32>
    %21 = vector.shape_cast %20 : vector<1x128xf32> to vector<128xf32>
    %22 = vector.shape_cast %21 : vector<128xf32> to vector<1x128xf32>
    %23 = vector.broadcast %22 : vector<1x128xf32> to vector<8x128xf32>
    %24 = arith.addf %19, %23 : vector<8x128xf32>
    %c3 = arith.constant 3 : index
    %c0_16 = arith.constant 0 : index
    %c0_17 = arith.constant 0 : index
    %25 = vector.load %arg2[%c3, %c0_16, %c0_17] : memref<10x128x128xf32, #tpu.memory_space<vmem>>, vector<1x128x128xf32>
    %26 = vector.shape_cast %25 : vector<1x128x128xf32> to vector<128x128xf32>
    %cst_18 = arith.constant dense<0.000000e+00> : vector<8x128xf32>
    %27 = tpu.matmul %24, %26, %cst_18 {dimension_numbers = #tpu.dot_dimension_numbers<[1], [0], [0], [1], [0, 0, 1, 1], [], []>} : vector<8x128xf32>, vector<128x128xf32>, vector<8x128xf32> -> vector<8x128xf32>
    %c3_19 = arith.constant 3 : index
    %c0_20 = arith.constant 0 : index
    %28 = vector.load %arg3[%c3_19, %c0_20] : memref<10x128xf32, #tpu.memory_space<vmem>>, vector<1x128xf32>
    %29 = vector.shape_cast %28 : vector<1x128xf32> to vector<128xf32>
    %30 = vector.shape_cast %29 : vector<128xf32> to vector<1x128xf32>
    %31 = vector.broadcast %30 : vector<1x128xf32> to vector<8x128xf32>
    %32 = arith.addf %27, %31 : vector<8x128xf32>
    %c4 = arith.constant 4 : index
    %c0_21 = arith.constant 0 : index
    %c0_22 = arith.constant 0 : index
    %33 = vector.load %arg2[%c4, %c0_21, %c0_22] : memref<10x128x128xf32, #tpu.memory_space<vmem>>, vector<1x128x128xf32>
    %34 = vector.shape_cast %33 : vector<1x128x128xf32> to vector<128x128xf32>
    %cst_23 = arith.constant dense<0.000000e+00> : vector<8x128xf32>
    %35 = tpu.matmul %32, %34, %cst_23 {dimension_numbers = #tpu.dot_dimension_numbers<[1], [0], [0], [1], [0, 0, 1, 1], [], []>} : vector<8x128xf32>, vector<128x128xf32>, vector<8x128xf32> -> vector<8x128xf32>
    %c4_24 = arith.constant 4 : index
    %c0_25 = arith.constant 0 : index
    %36 = vector.load %arg3[%c4_24, %c0_25] : memref<10x128xf32, #tpu.memory_space<vmem>>, vector<1x128xf32>
    %37 = vector.shape_cast %36 : vector<1x128xf32> to vector<128xf32>
    %38 = vector.shape_cast %37 : vector<128xf32> to vector<1x128xf32>
    %39 = vector.broadcast %38 : vector<1x128xf32> to vector<8x128xf32>
    %40 = arith.addf %35, %39 : vector<8x128xf32>
    %c5 = arith.constant 5 : index
    %c0_26 = arith.constant 0 : index
    %c0_27 = arith.constant 0 : index
    %41 = vector.load %arg2[%c5, %c0_26, %c0_27] : memref<10x128x128xf32, #tpu.memory_space<vmem>>, vector<1x128x128xf32>
    %42 = vector.shape_cast %41 : vector<1x128x128xf32> to vector<128x128xf32>
    %cst_28 = arith.constant dense<0.000000e+00> : vector<8x128xf32>
    %43 = tpu.matmul %40, %42, %cst_28 {dimension_numbers = #tpu.dot_dimension_numbers<[1], [0], [0], [1], [0, 0, 1, 1], [], []>} : vector<8x128xf32>, vector<128x128xf32>, vector<8x128xf32> -> vector<8x128xf32>
    %c5_29 = arith.constant 5 : index
    %c0_30 = arith.constant 0 : index
    %44 = vector.load %arg3[%c5_29, %c0_30] : memref<10x128xf32, #tpu.memory_space<vmem>>, vector<1x128xf32>
    %45 = vector.shape_cast %44 : vector<1x128xf32> to vector<128xf32>
    %46 = vector.shape_cast %45 : vector<128xf32> to vector<1x128xf32>
    %47 = vector.broadcast %46 : vector<1x128xf32> to vector<8x128xf32>
    %48 = arith.addf %43, %47 : vector<8x128xf32>
    %c6 = arith.constant 6 : index
    %c0_31 = arith.constant 0 : index
    %c0_32 = arith.constant 0 : index
    %49 = vector.load %arg2[%c6, %c0_31, %c0_32] : memref<10x128x128xf32, #tpu.memory_space<vmem>>, vector<1x128x128xf32>
    %50 = vector.shape_cast %49 : vector<1x128x128xf32> to vector<128x128xf32>
    %cst_33 = arith.constant dense<0.000000e+00> : vector<8x128xf32>
    %51 = tpu.matmul %48, %50, %cst_33 {dimension_numbers = #tpu.dot_dimension_numbers<[1], [0], [0], [1], [0, 0, 1, 1], [], []>} : vector<8x128xf32>, vector<128x128xf32>, vector<8x128xf32> -> vector<8x128xf32>
    %c6_34 = arith.constant 6 : index
    %c0_35 = arith.constant 0 : index
    %52 = vector.load %arg3[%c6_34, %c0_35] : memref<10x128xf32, #tpu.memory_space<vmem>>, vector<1x128xf32>
    %53 = vector.shape_cast %52 : vector<1x128xf32> to vector<128xf32>
    %54 = vector.shape_cast %53 : vector<128xf32> to vector<1x128xf32>
    %55 = vector.broadcast %54 : vector<1x128xf32> to vector<8x128xf32>
    %56 = arith.addf %51, %55 : vector<8x128xf32>
    %c7 = arith.constant 7 : index
    %c0_36 = arith.constant 0 : index
    %c0_37 = arith.constant 0 : index
    %57 = vector.load %arg2[%c7, %c0_36, %c0_37] : memref<10x128x128xf32, #tpu.memory_space<vmem>>, vector<1x128x128xf32>
    %58 = vector.shape_cast %57 : vector<1x128x128xf32> to vector<128x128xf32>
    %cst_38 = arith.constant dense<0.000000e+00> : vector<8x128xf32>
    %59 = tpu.matmul %56, %58, %cst_38 {dimension_numbers = #tpu.dot_dimension_numbers<[1], [0], [0], [1], [0, 0, 1, 1], [], []>} : vector<8x128xf32>, vector<128x128xf32>, vector<8x128xf32> -> vector<8x128xf32>
    %c7_39 = arith.constant 7 : index
    %c0_40 = arith.constant 0 : index
    %60 = vector.load %arg3[%c7_39, %c0_40] : memref<10x128xf32, #tpu.memory_space<vmem>>, vector<1x128xf32>
    %61 = vector.shape_cast %60 : vector<1x128xf32> to vector<128xf32>
    %62 = vector.shape_cast %61 : vector<128xf32> to vector<1x128xf32>
    %63 = vector.broadcast %62 : vector<1x128xf32> to vector<8x128xf32>
    %64 = arith.addf %59, %63 : vector<8x128xf32>
    %c8 = arith.constant 8 : index
    %c0_41 = arith.constant 0 : index
    %c0_42 = arith.constant 0 : index
    %65 = vector.load %arg2[%c8, %c0_41, %c0_42] : memref<10x128x128xf32, #tpu.memory_space<vmem>>, vector<1x128x128xf32>
    %66 = vector.shape_cast %65 : vector<1x128x128xf32> to vector<128x128xf32>
    %cst_43 = arith.constant dense<0.000000e+00> : vector<8x128xf32>
    %67 = tpu.matmul %64, %66, %cst_43 {dimension_numbers = #tpu.dot_dimension_numbers<[1], [0], [0], [1], [0, 0, 1, 1], [], []>} : vector<8x128xf32>, vector<128x128xf32>, vector<8x128xf32> -> vector<8x128xf32>
    %c8_44 = arith.constant 8 : index
    %c0_45 = arith.constant 0 : index
    %68 = vector.load %arg3[%c8_44, %c0_45] : memref<10x128xf32, #tpu.memory_space<vmem>>, vector<1x128xf32>
    %69 = vector.shape_cast %68 : vector<1x128xf32> to vector<128xf32>
    %70 = vector.shape_cast %69 : vector<128xf32> to vector<1x128xf32>
    %71 = vector.broadcast %70 : vector<1x128xf32> to vector<8x128xf32>
    %72 = arith.addf %67, %71 : vector<8x128xf32>
    %c9 = arith.constant 9 : index
    %c0_46 = arith.constant 0 : index
    %c0_47 = arith.constant 0 : index
    %73 = vector.load %arg2[%c9, %c0_46, %c0_47] : memref<10x128x128xf32, #tpu.memory_space<vmem>>, vector<1x128x128xf32>
    %74 = vector.shape_cast %73 : vector<1x128x128xf32> to vector<128x128xf32>
    %cst_48 = arith.constant dense<0.000000e+00> : vector<8x128xf32>
    %75 = tpu.matmul %72, %74, %cst_48 {dimension_numbers = #tpu.dot_dimension_numbers<[1], [0], [0], [1], [0, 0, 1, 1], [], []>} : vector<8x128xf32>, vector<128x128xf32>, vector<8x128xf32> -> vector<8x128xf32>
    %c9_49 = arith.constant 9 : index
    %c0_50 = arith.constant 0 : index
    %76 = vector.load %arg3[%c9_49, %c0_50] : memref<10x128xf32, #tpu.memory_space<vmem>>, vector<1x128xf32>
    %77 = vector.shape_cast %76 : vector<1x128xf32> to vector<128xf32>
    %78 = vector.shape_cast %77 : vector<128xf32> to vector<1x128xf32>
    %79 = vector.broadcast %78 : vector<1x128xf32> to vector<8x128xf32>
    %80 = arith.addf %75, %79 : vector<8x128xf32>
    %c0_51 = arith.constant 0 : index
    %c0_52 = arith.constant 0 : index
    %81 = vector.load %arg4[%c0_51, %c0_52] : memref<8x128xf32, #tpu.memory_space<vmem>>, vector<8x128xf32>
    tpu.vector_store %arg4[%c0_51, %c0_52], %80 {strides = array<i32>} : memref<8x128xf32, #tpu.memory_space<vmem>>, vector<8x128xf32>,
    return
  }
  func.func @transform_0(%arg0: i32) -> (i32, i32) {
    %c0_i32 = arith.constant 0 : i32
    %c0_i32_0 = arith.constant 0 : i32
    %c0_i32_1 = arith.constant 0 : i32
    return %c0_i32, %c0_i32_0 : i32, i32
  }
  func.func @transform_1(%arg0: i32) -> (i32, i32, i32) {
    %c0_i32 = arith.constant 0 : i32
    %c0_i32_0 = arith.constant 0 : i32
    %c0_i32_1 = arith.constant 0 : i32
    %c0_i32_2 = arith.constant 0 : i32
    return %c0_i32, %c0_i32_0, %c0_i32_1 : i32, i32, i32
  }
  func.func @transform_2(%arg0: i32) -> (i32, i32) {
    %c0_i32 = arith.constant 0 : i32
    %c0_i32_0 = arith.constant 0 : i32
    %c0_i32_1 = arith.constant 0 : i32
    return %c0_i32, %c0_i32_0 : i32, i32
  }
  func.func @transform_3(%arg0: i32) -> (i32, i32) {
    %c0_i32 = arith.constant 0 : i32
    %c0_i32_0 = arith.constant 0 : i32
    %c0_i32_1 = arith.constant 0 : i32
    return %c0_i32, %c0_i32_0 : i32, i32
  }
}

</mosaic_0001>

<llo_original>
// kernel: tpu_custom_call.1
$region0: #{tpu_custom_call.1}
  #allocation0 [shape = 'u32[]', space=smem, size = 0x4, offset = 0x4, fixed_abs, tag = 'smem constant byte address 0x4 - core index']
  #allocation1 [shape = 'u32[144,128]{1,0:T(1,128)}', space=vmem, size = 0x12000, scoped, tag = 'internal scratch']
  %s0 = inlined_call_operand.hbm [shape: f32[8,128], index: 0, kind: input, shape index: {}]
  %s1 = inlined_call_operand.hbm [shape: f32[10,128,128], index: 1, kind: input, shape index: {}]
  %s2 = inlined_call_operand.hbm [shape: f32[10,128], index: 2, kind: input, shape index: {}]
  %s3 = inlined_call_operand.hbm [shape: f32[8,128], index: 3, kind: output, shape index: {}]
  %s4 = sld [smem:[#allocation0]]
  $region34: #{tpu_custom_call.1} parent=0
    _
  %s6 = ssub.s32 1, %s4
  %s7 = scalar_select 0, %s6, %s4
  $region1: #{tpu_custom_call.1} parent=0
    #allocation2 [shape = 'u8[4096]{0}', space=vmem, size = 0x1000, scoped, tag = 'input window, operand 0, single buffered']
    #allocation3 [shape = 's32[1]{0}', space=sflag, size = 0x4, scoped, tag = 'scoped memory for tpu_custom_call.1']
    #allocation4 [shape = 's32[1]{0}', space=sflag, size = 0x4, scoped, tag = 'scoped memory for tpu_custom_call.1']
    #allocation5 [shape = 'u8[655360]{0}', space=vmem, size = 0xa0000, scoped, tag = 'input window, operand 1, single buffered']
    #allocation6 [shape = 's32[1]{0}', space=sflag, size = 0x4, scoped, tag = 'scoped memory for tpu_custom_call.1']
    #allocation7 [shape = 'u8[8192]{0}', space=vmem, size = 0x2000, scoped, tag = 'input window, operand 2, single buffered']
    #allocation8 [shape = 'u8[4096]{0}', space=vmem, size = 0x1000, scoped, tag = 'output window, operand 0, single buffered']
    %8 = vsyncpa [#allocation3], 0
    %9 = vsyncpa [#allocation6], 0
    %10 = vsyncpa [#allocation4], 0
    // Predicated region
    $region2: #{tpu_custom_call.1} parent=1 // pred_check
      _
    $region3: #{tpu_custom_call.1} parent=1 // pred_check_branch
      %12 = sbr.rel (0) target = $region5
    $region4: #{tpu_custom_call.1} parent=1 // pred_region
      %s14 = ssub.s32 128, 128
      %15 = vsyncadd [#allocation3], %s14
      %s17 = sshll.u32 [#allocation2], 4
      %s18 = int_to_ptr.vmem [resolvable:$true] %s17
      %20 = dma.hbm_to_vmem [thread:$0]  %s0, 128, %s18, [#allocation3]
    $region5: #{tpu_custom_call.1} parent=1 // pred_fallthru
      _
    // Predicated region
    $region6: #{tpu_custom_call.1} parent=1 // pred_check
      _
    $region7: #{tpu_custom_call.1} parent=1 // pred_check_branch
      %22 = sbr.rel (0) target = $region9
    $region8: #{tpu_custom_call.1} parent=1 // pred_region
      %s24 = ssub.s32 20480, 20480
      %25 = vsyncadd [#allocation6], %s24
      %s26 = sshll.u32 [#allocation5], 4
      %s27 = int_to_ptr.vmem [resolvable:$true] %s26
      %32 = dma.hbm_to_vmem [thread:$0]  %s1, 20480, %s27, [#allocation6], 128, 128, 8
    $region9: #{tpu_custom_call.1} parent=1 // pred_fallthru
      _
    // Predicated region
    $region10: #{tpu_custom_call.1} parent=1 // pred_check
      _
    $region11: #{tpu_custom_call.1} parent=1 // pred_check_branch
      %34 = sbr.rel (0) target = $region13
    $region12: #{tpu_custom_call.1} parent=1 // pred_region
      %s36 = ssub.s32 256, 256
      %37 = vsyncadd [#allocation6], %s36
      %s38 = sshll.u32 [#allocation7], 4
      %s39 = int_to_ptr.vmem [resolvable:$true] %s38
      %44 = dma.hbm_to_vmem [thread:$0]  %s2, 256, %s39, [#allocation6], 128, 128, 8
    $region13: #{tpu_custom_call.1} parent=1 // pred_fallthru
      _
    // Predicated region
    $region14: #{tpu_custom_call.1} parent=1 // pred_check
      _
    $region15: #{tpu_custom_call.1} parent=1 // pred_check_branch
      %46 = sbr.rel (0) target = $region17
    $region16: #{tpu_custom_call.1} parent=1 // pred_region
      %47 = dma.done [#allocation3], 128
    $region17: #{tpu_custom_call.1} parent=1 // pred_fallthru
      _
    // Predicated region
    $region18: #{tpu_custom_call.1} parent=1 // pred_check
      _
    $region19: #{tpu_custom_call.1} parent=1 // pred_check_branch
      %49 = sbr.rel (0) target = $region21
    $region20: #{tpu_custom_call.1} parent=1 // pred_region
      %50 = dma.done [#allocation6], 20480
    $region21: #{tpu_custom_call.1} parent=1 // pred_fallthru
      _
    // Predicated region
    $region22: #{tpu_custom_call.1} parent=1 // pred_check
      _
    $region23: #{tpu_custom_call.1} parent=1 // pred_check_branch
      %52 = sbr.rel (0) target = $region25
    $region24: #{tpu_custom_call.1} parent=1 // pred_region
      %53 = dma.done [#allocation6], 256
    $region25: #{tpu_custom_call.1} parent=1 // pred_fallthru
      _
    %v54 = vld [vmem:[#allocation2] sm:$0xff]
    %v55 = vld [vmem:[#allocation5] sm:$0xff]
    %v56 = vld [vmem:[#allocation5 + $0x8] sm:$0xff]
    %v57 = vld [vmem:[#allocation5 + $0x10] sm:$0xff]
    %v58 = vld [vmem:[#allocation5 + $0x18] sm:$0xff]
    %v59 = vld [vmem:[#allocation5 + $0x20] sm:$0xff]
    %v60 = vld [vmem:[#allocation5 + $0x28] sm:$0xff]
    %v61 = vld [vmem:[#allocation5 + $0x30] sm:$0xff]
    %v62 = vld [vmem:[#allocation5 + $0x38] sm:$0xff]
    %v63 = vld [vmem:[#allocation5 + $0x40] sm:$0xff]
    %v64 = vld [vmem:[#allocation5 + $0x48] sm:$0xff]
    %v65 = vld [vmem:[#allocation5 + $0x50] sm:$0xff]
    %v66 = vld [vmem:[#allocation5 + $0x58] sm:$0xff]
    %v67 = vld [vmem:[#allocation5 + $0x60] sm:$0xff]
    %v68 = vld [vmem:[#allocation5 + $0x68] sm:$0xff]
    %v69 = vld [vmem:[#allocation5 + $0x70] sm:$0xff]
    %v70 = vld [vmem:[#allocation5 + $0x78] sm:$0xff]
    %v71 = vld [vmem:[#allocation7] sm:$0x1]
    %v72 = vlaneseq
    %v73 = vshrl.u32 %v72, 7
    %v74 = vsub.s32 0, %v73
    %v75 = vrot.slane %v71, %v74
    %76 = vmatprep.subr.mxu0 0.0
    %77 = vmatpush1.msra.mxu0 %v70
    %78 = vmatprep.subr.mxu0 0.0
    %79 = vmatpush1.msra.mxu0 %v69
    %80 = vmatprep.subr.mxu0 0.0
    %81 = vmatpush1.msra.mxu0 %v68
    %82 = vmatprep.subr.mxu0 0.0
    %83 = vmatpush1.msra.mxu0 %v67
    %84 = vmatprep.subr.mxu0 0.0
    %85 = vmatpush1.msra.mxu0 %v66
    %86 = vmatprep.subr.mxu0 0.0
    %87 = vmatpush1.msra.mxu0 %v65
    %88 = vmatprep.subr.mxu0 0.0
    %89 = vmatpush1.msra.mxu0 %v64
    %90 = vmatprep.subr.mxu0 0.0
    %91 = vmatpush1.msra.mxu0 %v63
    %92 = vmatprep.subr.mxu0 0.0
    %93 = vmatpush1.msra.mxu0 %v62
    %94 = vmatprep.subr.mxu0 0.0
    %95 = vmatpush1.msra.mxu0 %v61
    %96 = vmatprep.subr.mxu0 0.0
    %97 = vmatpush1.msra.mxu0 %v60
    %98 = vmatprep.subr.mxu0 0.0
    %99 = vmatpush1.msra.mxu0 %v59
    %100 = vmatprep.subr.mxu0 0.0
    %101 = vmatpush1.msra.mxu0 %v58
    %102 = vmatprep.subr.mxu0 0.0
    %103 = vmatpush1.msra.mxu0 %v57
    %104 = vmatprep.subr.mxu0 0.0
    %105 = vmatpush1.msra.mxu0 %v56
    %106 = vmatprep.subr.mxu0 0.0
    %107 = vmatpush1.msra.mxu0 %v55
    %108 = vmatprep.subr.mxu0 0.0
    %109 = vmatpush2.msra.mxu0 0.0
    %110 = vmatprep.subr.mxu0 0.0
    %111 = vmatpush2.msra.mxu0 0.0
    %112 = vmatprep.subr.mxu0 0.0
    %113 = vmatpush2.msra.mxu0 0.0
    %114 = vmatprep.subr.mxu0 0.0
    %115 = vmatpush2.msra.mxu0 0.0
    %116 = vmatprep.subr.mxu0 0.0
    %117 = vmatpush2.msra.mxu0 0.0
    %118 = vmatprep.subr.mxu0 0.0
    %119 = vmatpush2.msra.mxu0 0.0
    %120 = vmatprep.subr.mxu0 0.0
    %121 = vmatpush2.msra.mxu0 0.0
    %122 = vmatprep.subr.mxu0 0.0
    %123 = vmatpush2.msra.mxu0 0.0
    %124 = vmatprep.subr.mxu0 0.0
    %125 = vmatpush2.msra.mxu0 0.0
    %126 = vmatprep.subr.mxu0 0.0
    %127 = vmatpush2.msra.mxu0 0.0
    %128 = vmatprep.subr.mxu0 0.0
    %129 = vmatpush2.msra.mxu0 0.0
    %130 = vmatprep.subr.mxu0 0.0
    %131 = vmatpush2.msra.mxu0 0.0
    %132 = vmatprep.subr.mxu0 0.0
    %133 = vmatpush2.msra.mxu0 0.0
    %134 = vmatprep.subr.mxu0 0.0
    %135 = vmatpush2.msra.mxu0 0.0
    %136 = vmatprep.subr.mxu0 0.0
    %137 = vmatpush2.msra.mxu0 0.0
    %138 = vmatprep.subr.mxu0 0.0
    %139 = vmatpush2.msra.mxu0 0.0
    %140 = vmatprep.mubr.f32.mxu0 0.0
    %141 = vmatmul.mubr.f32.gmra.mxu0 %v54
    %v142 = vpop.f32.mrf.mxu0
    %v143 = vadd.f32 %v75, %v142
    %v144 = vpop.f32.mrf.mxu0
    %145 = vdwg.mxu0
    %s146 = scalar_lea.vmem [#allocation5], 128
    %v147 = vld [vmem:[%s146] sm:$0xff]
    %v148 = vld [vmem:[%s146 + $0x8] sm:$0xff]
    %v149 = vld [vmem:[%s146 + $0x10] sm:$0xff]
    %v150 = vld [vmem:[%s146 + $0x18] sm:$0xff]
    %v151 = vld [vmem:[%s146 + $0x20] sm:$0xff]
    %v152 = vld [vmem:[%s146 + $0x28] sm:$0xff]
    %v153 = vld [vmem:[%s146 + $0x30] sm:$0xff]
    %v154 = vld [vmem:[%s146 + $0x38] sm:$0xff]
    %v155 = vld [vmem:[%s146 + $0x40] sm:$0xff]
    %v156 = vld [vmem:[%s146 + $0x48] sm:$0xff]
    %v157 = vld [vmem:[%s146 + $0x50] sm:$0xff]
    %v158 = vld [vmem:[%s146 + $0x58] sm:$0xff]
    %v159 = vld [vmem:[%s146 + $0x60] sm:$0xff]
    %v160 = vld [vmem:[%s146 + $0x68] sm:$0xff]
    %v161 = vld [vmem:[%s146 + $0x70] sm:$0xff]
    %v162 = vld [vmem:[%s146 + $0x78] sm:$0xff]
    %v163 = vld [vmem:[#allocation7 + $0x1] sm:$0x1]
    %v164 = vlaneseq
    %v165 = vshrl.u32 %v164, 7
    %v166 = vsub.s32 0, %v165
    %v167 = vrot.slane %v163, %v166
    %168 = vmatprep.subr.mxu0 0.0
    %169 = vmatpush1.msra.mxu0 %v162
    %170 = vmatprep.subr.mxu0 0.0
    %171 = vmatpush1.msra.mxu0 %v161
    %172 = vmatprep.subr.mxu0 0.0
    %173 = vmatpush1.msra.mxu0 %v160
    %174 = vmatprep.subr.mxu0 0.0
    %175 = vmatpush1.msra.mxu0 %v159
    %176 = vmatprep.subr.mxu0 0.0
    %177 = vmatpush1.msra.mxu0 %v158
    %178 = vmatprep.subr.mxu0 0.0
    %179 = vmatpush1.msra.mxu0 %v157
    %180 = vmatprep.subr.mxu0 0.0
    %181 = vmatpush1.msra.mxu0 %v156
    %182 = vmatprep.subr.mxu0 0.0
    %183 = vmatpush1.msra.mxu0 %v155
    %184 = vmatprep.subr.mxu0 0.0
    %185 = vmatpush1.msra.mxu0 %v154
    %186 = vmatprep.subr.mxu0 0.0
    %187 = vmatpush1.msra.mxu0 %v153
    %188 = vmatprep.subr.mxu0 0.0
    %189 = vmatpush1.msra.mxu0 %v152
    %190 = vmatprep.subr.mxu0 0.0
    %191 = vmatpush1.msra.mxu0 %v151
    %192 = vmatprep.subr.mxu0 0.0
    %193 = vmatpush1.msra.mxu0 %v150
    %194 = vmatprep.subr.mxu0 0.0
    %195 = vmatpush1.msra.mxu0 %v149
    %196 = vmatprep.subr.mxu0 0.0
    %197 = vmatpush1.msra.mxu0 %v148
    %198 = vmatprep.subr.mxu0 0.0
    %199 = vmatpush1.msra.mxu0 %v147
    %200 = vmatprep.subr.mxu0 0.0
    %201 = vmatpush2.msra.mxu0 0.0
    %202 = vmatprep.subr.mxu0 0.0
    %203 = vmatpush2.msra.mxu0 0.0
    %204 = vmatprep.subr.mxu0 0.0
    %205 = vmatpush2.msra.mxu0 0.0
    %206 = vmatprep.subr.mxu0 0.0
    %207 = vmatpush2.msra.mxu0 0.0
    %208 = vmatprep.subr.mxu0 0.0
    %209 = vmatpush2.msra.mxu0 0.0
    %210 = vmatprep.subr.mxu0 0.0
    %211 = vmatpush2.msra.mxu0 0.0
    %212 = vmatprep.subr.mxu0 0.0
    %213 = vmatpush2.msra.mxu0 0.0
    %214 = vmatprep.subr.mxu0 0.0
    %215 = vmatpush2.msra.mxu0 0.0
    %216 = vmatprep.subr.mxu0 0.0
    %217 = vmatpush2.msra.mxu0 0.0
    %218 = vmatprep.subr.mxu0 0.0
    %219 = vmatpush2.msra.mxu0 0.0
    %220 = vmatprep.subr.mxu0 0.0
    %221 = vmatpush2.msra.mxu0 0.0
    %222 = vmatprep.subr.mxu0 0.0
    %223 = vmatpush2.msra.mxu0 0.0
    %224 = vmatprep.subr.mxu0 0.0
    %225 = vmatpush2.msra.mxu0 0.0
    %226 = vmatprep.subr.mxu0 0.0
    %227 = vmatpush2.msra.mxu0 0.0
    %228 = vmatprep.subr.mxu0 0.0
    %229 = vmatpush2.msra.mxu0 0.0
    %230 = vmatprep.subr.mxu0 0.0
    %231 = vmatpush2.msra.mxu0 0.0
    %232 = vmatprep.mubr.f32.mxu0 0.0
    %233 = vmatmul.mubr.f32.gmra.mxu0 %v143
    %v234 = vpop.f32.mrf.mxu0
    %v235 = vadd.f32 %v167, %v234
    %v236 = vpop.f32.mrf.mxu0
    %237 = vdwg.mxu0
    %s238 = scalar_lea.vmem [#allocation5], 256
    %v239 = vld [vmem:[%s238] sm:$0xff]
    %v240 = vld [vmem:[%s238 + $0x8] sm:$0xff]
    %v241 = vld [vmem:[%s238 + $0x10] sm:$0xff]
    %v242 = vld [vmem:[%s238 + $0x18] sm:$0xff]
    %v243 = vld [vmem:[%s238 + $0x20] sm:$0xff]
    %v244 = vld [vmem:[%s238 + $0x28] sm:$0xff]
    %v245 = vld [vmem:[%s238 + $0x30] sm:$0xff]
    %v246 = vld [vmem:[%s238 + $0x38] sm:$0xff]
    %v247 = vld [vmem:[%s238 + $0x40] sm:$0xff]
    %v248 = vld [vmem:[%s238 + $0x48] sm:$0xff]
    %v249 = vld [vmem:[%s238 + $0x50] sm:$0xff]
    %v250 = vld [vmem:[%s238 + $0x58] sm:$0xff]
    %v251 = vld [vmem:[%s238 + $0x60] sm:$0xff]
    %v252 = vld [vmem:[%s238 + $0x68] sm:$0xff]
    %v253 = vld [vmem:[%s238 + $0x70] sm:$0xff]
    %v254 = vld [vmem:[%s238 + $0x78] sm:$0xff]
    %v255 = vld [vmem:[#allocation7 + $0x2] sm:$0x1]
    %v256 = vlaneseq
    %v257 = vshrl.u32 %v256, 7
    %v258 = vsub.s32 0, %v257
    %v259 = vrot.slane %v255, %v258
    %260 = vmatprep.subr.mxu0 0.0
    %261 = vmatpush1.msra.mxu0 %v254
    %262 = vmatprep.subr.mxu0 0.0
    %263 = vmatpush1.msra.mxu0 %v253
    %264 = vmatprep.subr.mxu0 0.0
    %265 = vmatpush1.msra.mxu0 %v252
    %266 = vmatprep.subr.mxu0 0.0
    %267 = vmatpush1.msra.mxu0 %v251
    %268 = vmatprep.subr.mxu0 0.0
    %269 = vmatpush1.msra.mxu0 %v250
    %270 = vmatprep.subr.mxu0 0.0
    %271 = vmatpush1.msra.mxu0 %v249
    %272 = vmatprep.subr.mxu0 0.0
    %273 = vmatpush1.msra.mxu0 %v248
    %274 = vmatprep.subr.mxu0 0.0
    %275 = vmatpush1.msra.mxu0 %v247
    %276 = vmatprep.subr.mxu0 0.0
    %277 = vmatpush1.msra.mxu0 %v246
    %278 = vmatprep.subr.mxu0 0.0
    %279 = vmatpush1.msra.mxu0 %v245
    %280 = vmatprep.subr.mxu0 0.0
    %281 = vmatpush1.msra.mxu0 %v244
    %282 = vmatprep.subr.mxu0 0.0
    %283 = vmatpush1.msra.mxu0 %v243
    %284 = vmatprep.subr.mxu0 0.0
    %285 = vmatpush1.msra.mxu0 %v242
    %286 = vmatprep.subr.mxu0 0.0
    %287 = vmatpush1.msra.mxu0 %v241
    %288 = vmatprep.subr.mxu0 0.0
    %289 = vmatpush1.msra.mxu0 %v240
    %290 = vmatprep.subr.mxu0 0.0
    %291 = vmatpush1.msra.mxu0 %v239
    %292 = vmatprep.subr.mxu0 0.0
    %293 = vmatpush2.msra.mxu0 0.0
    %294 = vmatprep.subr.mxu0 0.0
    %295 = vmatpush2.msra.mxu0 0.0
    %296 = vmatprep.subr.mxu0 0.0
    %297 = vmatpush2.msra.mxu0 0.0
    %298 = vmatprep.subr.mxu0 0.0
    %299 = vmatpush2.msra.mxu0 0.0
    %300 = vmatprep.subr.mxu0 0.0
    %301 = vmatpush2.msra.mxu0 0.0
    %302 = vmatprep.subr.mxu0 0.0
    %303 = vmatpush2.msra.mxu0 0.0
    %304 = vmatprep.subr.mxu0 0.0
    %305 = vmatpush2.msra.mxu0 0.0
    %306 = vmatprep.subr.mxu0 0.0
    %307 = vmatpush2.msra.mxu0 0.0
    %308 = vmatprep.subr.mxu0 0.0
    %309 = vmatpush2.msra.mxu0 0.0
    %310 = vmatprep.subr.mxu0 0.0
    %311 = vmatpush2.msra.mxu0 0.0
    %312 = vmatprep.subr.mxu0 0.0
    %313 = vmatpush2.msra.mxu0 0.0
    %314 = vmatprep.subr.mxu0 0.0
    %315 = vmatpush2.msra.mxu0 0.0
    %316 = vmatprep.subr.mxu0 0.0
    %317 = vmatpush2.msra.mxu0 0.0
    %318 = vmatprep.subr.mxu0 0.0
    %319 = vmatpush2.msra.mxu0 0.0
    %320 = vmatprep.subr.mxu0 0.0
    %321 = vmatpush2.msra.mxu0 0.0
    %322 = vmatprep.subr.mxu0 0.0
    %323 = vmatpush2.msra.mxu0 0.0
    %324 = vmatprep.mubr.f32.mxu0 0.0
    %325 = vmatmul.mubr.f32.gmra.mxu0 %v235
    %v326 = vpop.f32.mrf.mxu0
    %v327 = vadd.f32 %v259, %v326
    %v328 = vpop.f32.mrf.mxu0
    %329 = vdwg.mxu0
    %s330 = scalar_lea.vmem [#allocation5], 384
    %v331 = vld [vmem:[%s330] sm:$0xff]
    %v332 = vld [vmem:[%s330 + $0x8] sm:$0xff]
    %v333 = vld [vmem:[%s330 + $0x10] sm:$0xff]
    %v334 = vld [vmem:[%s330 + $0x18] sm:$0xff]
    %v335 = vld [vmem:[%s330 + $0x20] sm:$0xff]
    %v336 = vld [vmem:[%s330 + $0x28] sm:$0xff]
    %v337 = vld [vmem:[%s330 + $0x30] sm:$0xff]
    %v338 = vld [vmem:[%s330 + $0x38] sm:$0xff]
    %v339 = vld [vmem:[%s330 + $0x40] sm:$0xff]
    %v340 = vld [vmem:[%s330 + $0x48] sm:$0xff]
    %v341 = vld [vmem:[%s330 + $0x50] sm:$0xff]
    %v342 = vld [vmem:[%s330 + $0x58] sm:$0xff]
    %v343 = vld [vmem:[%s330 + $0x60] sm:$0xff]
    %v344 = vld [vmem:[%s330 + $0x68] sm:$0xff]
    %v345 = vld [vmem:[%s330 + $0x70] sm:$0xff]
    %v346 = vld [vmem:[%s330 + $0x78] sm:$0xff]
    %v347 = vld [vmem:[#allocation7 + $0x3] sm:$0x1]
    %v348 = vlaneseq
    %v349 = vshrl.u32 %v348, 7
    %v350 = vsub.s32 0, %v349
    %v351 = vrot.slane %v347, %v350
    %352 = vmatprep.subr.mxu0 0.0
    %353 = vmatpush1.msra.mxu0 %v346
    %354 = vmatprep.subr.mxu0 0.0
    %355 = vmatpush1.msra.mxu0 %v345
    %356 = vmatprep.subr.mxu0 0.0
    %357 = vmatpush1.msra.mxu0 %v344
    %358 = vmatprep.subr.mxu0 0.0
    %359 = vmatpush1.msra.mxu0 %v343
    %360 = vmatprep.subr.mxu0 0.0
    %361 = vmatpush1.msra.mxu0 %v342
    %362 = vmatprep.subr.mxu0 0.0
    %363 = vmatpush1.msra.mxu0 %v341
    %364 = vmatprep.subr.mxu0 0.0
    %365 = vmatpush1.msra.mxu0 %v340
    %366 = vmatprep.subr.mxu0 0.0
    %367 = vmatpush1.msra.mxu0 %v339
    %368 = vmatprep.subr.mxu0 0.0
    %369 = vmatpush1.msra.mxu0 %v338
    %370 = vmatprep.subr.mxu0 0.0
    %371 = vmatpush1.msra.mxu0 %v337
    %372 = vmatprep.subr.mxu0 0.0
    %373 = vmatpush1.msra.mxu0 %v336
    %374 = vmatprep.subr.mxu0 0.0
    %375 = vmatpush1.msra.mxu0 %v335
    %376 = vmatprep.subr.mxu0 0.0
    %377 = vmatpush1.msra.mxu0 %v334
    %378 = vmatprep.subr.mxu0 0.0
    %379 = vmatpush1.msra.mxu0 %v333
    %380 = vmatprep.subr.mxu0 0.0
    %381 = vmatpush1.msra.mxu0 %v332
    %382 = vmatprep.subr.mxu0 0.0
    %383 = vmatpush1.msra.mxu0 %v331
    %384 = vmatprep.subr.mxu0 0.0
    %385 = vmatpush2.msra.mxu0 0.0
    %386 = vmatprep.subr.mxu0 0.0
    %387 = vmatpush2.msra.mxu0 0.0
    %388 = vmatprep.subr.mxu0 0.0
    %389 = vmatpush2.msra.mxu0 0.0
    %390 = vmatprep.subr.mxu0 0.0
    %391 = vmatpush2.msra.mxu0 0.0
    %392 = vmatprep.subr.mxu0 0.0
    %393 = vmatpush2.msra.mxu0 0.0
    %394 = vmatprep.subr.mxu0 0.0
    %395 = vmatpush2.msra.mxu0 0.0
    %396 = vmatprep.subr.mxu0 0.0
    %397 = vmatpush2.msra.mxu0 0.0
    %398 = vmatprep.subr.mxu0 0.0
    %399 = vmatpush2.msra.mxu0 0.0
    %400 = vmatprep.subr.mxu0 0.0
    %401 = vmatpush2.msra.mxu0 0.0
    %402 = vmatprep.subr.mxu0 0.0
    %403 = vmatpush2.msra.mxu0 0.0
    %404 = vmatprep.subr.mxu0 0.0
    %405 = vmatpush2.msra.mxu0 0.0
    %406 = vmatprep.subr.mxu0 0.0
    %407 = vmatpush2.msra.mxu0 0.0
    %408 = vmatprep.subr.mxu0 0.0
    %409 = vmatpush2.msra.mxu0 0.0
    %410 = vmatprep.subr.mxu0 0.0
    %411 = vmatpush2.msra.mxu0 0.0
    %412 = vmatprep.subr.mxu0 0.0
    %413 = vmatpush2.msra.mxu0 0.0
    %414 = vmatprep.subr.mxu0 0.0
    %415 = vmatpush2.msra.mxu0 0.0
    %416 = vmatprep.mubr.f32.mxu0 0.0
    %417 = vmatmul.mubr.f32.gmra.mxu0 %v327
    %v418 = vpop.f32.mrf.mxu0
    %v419 = vadd.f32 %v351, %v418
    %v420 = vpop.f32.mrf.mxu0
    %421 = vdwg.mxu0
    %s422 = scalar_lea.vmem [#allocation5], 512
    %v423 = vld [vmem:[%s422] sm:$0xff]
    %v424 = vld [vmem:[%s422 + $0x8] sm:$0xff]
    %v425 = vld [vmem:[%s422 + $0x10] sm:$0xff]
    %v426 = vld [vmem:[%s422 + $0x18] sm:$0xff]
    %v427 = vld [vmem:[%s422 + $0x20] sm:$0xff]
    %v428 = vld [vmem:[%s422 + $0x28] sm:$0xff]
    %v429 = vld [vmem:[%s422 + $0x30] sm:$0xff]
    %v430 = vld [vmem:[%s422 + $0x38] sm:$0xff]
    %v431 = vld [vmem:[%s422 + $0x40] sm:$0xff]
    %v432 = vld [vmem:[%s422 + $0x48] sm:$0xff]
    %v433 = vld [vmem:[%s422 + $0x50] sm:$0xff]
    %v434 = vld [vmem:[%s422 + $0x58] sm:$0xff]
    %v435 = vld [vmem:[%s422 + $0x60] sm:$0xff]
    %v436 = vld [vmem:[%s422 + $0x68] sm:$0xff]
    %v437 = vld [vmem:[%s422 + $0x70] sm:$0xff]
    %v438 = vld [vmem:[%s422 + $0x78] sm:$0xff]
    %v439 = vld [vmem:[#allocation7 + $0x4] sm:$0x1]
    %v440 = vlaneseq
    %v441 = vshrl.u32 %v440, 7
    %v442 = vsub.s32 0, %v441
    %v443 = vrot.slane %v439, %v442
    %444 = vmatprep.subr.mxu0 0.0
    %445 = vmatpush1.msra.mxu0 %v438
    %446 = vmatprep.subr.mxu0 0.0
    %447 = vmatpush1.msra.mxu0 %v437
    %448 = vmatprep.subr.mxu0 0.0
    %449 = vmatpush1.msra.mxu0 %v436
    %450 = vmatprep.subr.mxu0 0.0
    %451 = vmatpush1.msra.mxu0 %v435
    %452 = vmatprep.subr.mxu0 0.0
    %453 = vmatpush1.msra.mxu0 %v434
    %454 = vmatprep.subr.mxu0 0.0
    %455 = vmatpush1.msra.mxu0 %v433
    %456 = vmatprep.subr.mxu0 0.0
    %457 = vmatpush1.msra.mxu0 %v432
    %458 = vmatprep.subr.mxu0 0.0
    %459 = vmatpush1.msra.mxu0 %v431
    %460 = vmatprep.subr.mxu0 0.0
    %461 = vmatpush1.msra.mxu0 %v430
    %462 = vmatprep.subr.mxu0 0.0
    %463 = vmatpush1.msra.mxu0 %v429
    %464 = vmatprep.subr.mxu0 0.0
    %465 = vmatpush1.msra.mxu0 %v428
    %466 = vmatprep.subr.mxu0 0.0
    %467 = vmatpush1.msra.mxu0 %v427
    %468 = vmatprep.subr.mxu0 0.0
    %469 = vmatpush1.msra.mxu0 %v426
    %470 = vmatprep.subr.mxu0 0.0
    %471 = vmatpush1.msra.mxu0 %v425
    %472 = vmatprep.subr.mxu0 0.0
    %473 = vmatpush1.msra.mxu0 %v424
    %474 = vmatprep.subr.mxu0 0.0
    %475 = vmatpush1.msra.mxu0 %v423
    %476 = vmatprep.subr.mxu0 0.0
    %477 = vmatpush2.msra.mxu0 0.0
    %478 = vmatprep.subr.mxu0 0.0
    %479 = vmatpush2.msra.mxu0 0.0
    %480 = vmatprep.subr.mxu0 0.0
    %481 = vmatpush2.msra.mxu0 0.0
    %482 = vmatprep.subr.mxu0 0.0
    %483 = vmatpush2.msra.mxu0 0.0
    %484 = vmatprep.subr.mxu0 0.0
    %485 = vmatpush2.msra.mxu0 0.0
    %486 = vmatprep.subr.mxu0 0.0
    %487 = vmatpush2.msra.mxu0 0.0
    %488 = vmatprep.subr.mxu0 0.0
    %489 = vmatpush2.msra.mxu0 0.0
    %490 = vmatprep.subr.mxu0 0.0
    %491 = vmatpush2.msra.mxu0 0.0
    %492 = vmatprep.subr.mxu0 0.0
    %493 = vmatpush2.msra.mxu0 0.0
    %494 = vmatprep.subr.mxu0 0.0
    %495 = vmatpush2.msra.mxu0 0.0
    %496 = vmatprep.subr.mxu0 0.0
    %497 = vmatpush2.msra.mxu0 0.0
    %498 = vmatprep.subr.mxu0 0.0
    %499 = vmatpush2.msra.mxu0 0.0
    %500 = vmatprep.subr.mxu0 0.0
    %501 = vmatpush2.msra.mxu0 0.0
    %502 = vmatprep.subr.mxu0 0.0
    %503 = vmatpush2.msra.mxu0 0.0
    %504 = vmatprep.subr.mxu0 0.0
    %505 = vmatpush2.msra.mxu0 0.0
    %506 = vmatprep.subr.mxu0 0.0
    %507 = vmatpush2.msra.mxu0 0.0
    %508 = vmatprep.mubr.f32.mxu0 0.0
    %509 = vmatmul.mubr.f32.gmra.mxu0 %v419
    %v510 = vpop.f32.mrf.mxu0
    %v511 = vadd.f32 %v443, %v510
    %v512 = vpop.f32.mrf.mxu0
    %513 = vdwg.mxu0
    %s514 = scalar_lea.vmem [#allocation5], 640
    %v515 = vld [vmem:[%s514] sm:$0xff]
    %v516 = vld [vmem:[%s514 + $0x8] sm:$0xff]
    %v517 = vld [vmem:[%s514 + $0x10] sm:$0xff]
    %v518 = vld [vmem:[%s514 + $0x18] sm:$0xff]
    %v519 = vld [vmem:[%s514 + $0x20] sm:$0xff]
    %v520 = vld [vmem:[%s514 + $0x28] sm:$0xff]
    %v521 = vld [vmem:[%s514 + $0x30] sm:$0xff]
    %v522 = vld [vmem:[%s514 + $0x38] sm:$0xff]
    %v523 = vld [vmem:[%s514 + $0x40] sm:$0xff]
    %v524 = vld [vmem:[%s514 + $0x48] sm:$0xff]
    %v525 = vld [vmem:[%s514 + $0x50] sm:$0xff]
    %v526 = vld [vmem:[%s514 + $0x58] sm:$0xff]
    %v527 = vld [vmem:[%s514 + $0x60] sm:$0xff]
    %v528 = vld [vmem:[%s514 + $0x68] sm:$0xff]
    %v529 = vld [vmem:[%s514 + $0x70] sm:$0xff]
    %v530 = vld [vmem:[%s514 + $0x78] sm:$0xff]
    %v531 = vld [vmem:[#allocation7 + $0x5] sm:$0x1]
    %v532 = vlaneseq
    %v533 = vshrl.u32 %v532, 7
    %v534 = vsub.s32 0, %v533
    %v535 = vrot.slane %v531, %v534
    %536 = vmatprep.subr.mxu0 0.0
    %537 = vmatpush1.msra.mxu0 %v530
    %538 = vmatprep.subr.mxu0 0.0
    %539 = vmatpush1.msra.mxu0 %v529
    %540 = vmatprep.subr.mxu0 0.0
    %541 = vmatpush1.msra.mxu0 %v528
    %542 = vmatprep.subr.mxu0 0.0
    %543 = vmatpush1.msra.mxu0 %v527
    %544 = vmatprep.subr.mxu0 0.0
    %545 = vmatpush1.msra.mxu0 %v526
    %546 = vmatprep.subr.mxu0 0.0
    %547 = vmatpush1.msra.mxu0 %v525
    %548 = vmatprep.subr.mxu0 0.0
    %549 = vmatpush1.msra.mxu0 %v524
    %550 = vmatprep.subr.mxu0 0.0
    %551 = vmatpush1.msra.mxu0 %v523
    %552 = vmatprep.subr.mxu0 0.0
    %553 = vmatpush1.msra.mxu0 %v522
    %554 = vmatprep.subr.mxu0 0.0
    %555 = vmatpush1.msra.mxu0 %v521
    %556 = vmatprep.subr.mxu0 0.0
    %557 = vmatpush1.msra.mxu0 %v520
    %558 = vmatprep.subr.mxu0 0.0
    %559 = vmatpush1.msra.mxu0 %v519
    %560 = vmatprep.subr.mxu0 0.0
    %561 = vmatpush1.msra.mxu0 %v518
    %562 = vmatprep.subr.mxu0 0.0
    %563 = vmatpush1.msra.mxu0 %v517
    %564 = vmatprep.subr.mxu0 0.0
    %565 = vmatpush1.msra.mxu0 %v516
    %566 = vmatprep.subr.mxu0 0.0
    %567 = vmatpush1.msra.mxu0 %v515
    %568 = vmatprep.subr.mxu0 0.0
    %569 = vmatpush2.msra.mxu0 0.0
    %570 = vmatprep.subr.mxu0 0.0
    %571 = vmatpush2.msra.mxu0 0.0
    %572 = vmatprep.subr.mxu0 0.0
    %573 = vmatpush2.msra.mxu0 0.0
    %574 = vmatprep.subr.mxu0 0.0
    %575 = vmatpush2.msra.mxu0 0.0
    %576 = vmatprep.subr.mxu0 0.0
    %577 = vmatpush2.msra.mxu0 0.0
    %578 = vmatprep.subr.mxu0 0.0
    %579 = vmatpush2.msra.mxu0 0.0
    %580 = vmatprep.subr.mxu0 0.0
    %581 = vmatpush2.msra.mxu0 0.0
    %582 = vmatprep.subr.mxu0 0.0
    %583 = vmatpush2.msra.mxu0 0.0
    %584 = vmatprep.subr.mxu0 0.0
    %585 = vmatpush2.msra.mxu0 0.0
    %586 = vmatprep.subr.mxu0 0.0
    %587 = vmatpush2.msra.mxu0 0.0
    %588 = vmatprep.subr.mxu0 0.0
    %589 = vmatpush2.msra.mxu0 0.0
    %590 = vmatprep.subr.mxu0 0.0
    %591 = vmatpush2.msra.mxu0 0.0
    %592 = vmatprep.subr.mxu0 0.0
    %593 = vmatpush2.msra.mxu0 0.0
    %594 = vmatprep.subr.mxu0 0.0
    %595 = vmatpush2.msra.mxu0 0.0
    %596 = vmatprep.subr.mxu0 0.0
    %597 = vmatpush2.msra.mxu0 0.0
    %598 = vmatprep.subr.mxu0 0.0
    %599 = vmatpush2.msra.mxu0 0.0
    %600 = vmatprep.mubr.f32.mxu0 0.0
    %601 = vmatmul.mubr.f32.gmra.mxu0 %v511
    %v602 = vpop.f32.mrf.mxu0
    %v603 = vadd.f32 %v535, %v602
    %v604 = vpop.f32.mrf.mxu0
    %605 = vdwg.mxu0
    %s606 = scalar_lea.vmem [#allocation5], 768
    %v607 = vld [vmem:[%s606] sm:$0xff]
    %v608 = vld [vmem:[%s606 + $0x8] sm:$0xff]
    %v609 = vld [vmem:[%s606 + $0x10] sm:$0xff]
    %v610 = vld [vmem:[%s606 + $0x18] sm:$0xff]
    %v611 = vld [vmem:[%s606 + $0x20] sm:$0xff]
    %v612 = vld [vmem:[%s606 + $0x28] sm:$0xff]
    %v613 = vld [vmem:[%s606 + $0x30] sm:$0xff]
    %v614 = vld [vmem:[%s606 + $0x38] sm:$0xff]
    %v615 = vld [vmem:[%s606 + $0x40] sm:$0xff]
    %v616 = vld [vmem:[%s606 + $0x48] sm:$0xff]
    %v617 = vld [vmem:[%s606 + $0x50] sm:$0xff]
    %v618 = vld [vmem:[%s606 + $0x58] sm:$0xff]
    %v619 = vld [vmem:[%s606 + $0x60] sm:$0xff]
    %v620 = vld [vmem:[%s606 + $0x68] sm:$0xff]
    %v621 = vld [vmem:[%s606 + $0x70] sm:$0xff]
    %v622 = vld [vmem:[%s606 + $0x78] sm:$0xff]
    %v623 = vld [vmem:[#allocation7 + $0x6] sm:$0x1]
    %v624 = vlaneseq
    %v625 = vshrl.u32 %v624, 7
    %v626 = vsub.s32 0, %v625
    %v627 = vrot.slane %v623, %v626
    %628 = vmatprep.subr.mxu0 0.0
    %629 = vmatpush1.msra.mxu0 %v622
    %630 = vmatprep.subr.mxu0 0.0
    %631 = vmatpush1.msra.mxu0 %v621
    %632 = vmatprep.subr.mxu0 0.0
    %633 = vmatpush1.msra.mxu0 %v620
    %634 = vmatprep.subr.mxu0 0.0
    %635 = vmatpush1.msra.mxu0 %v619
    %636 = vmatprep.subr.mxu0 0.0
    %637 = vmatpush1.msra.mxu0 %v618
    %638 = vmatprep.subr.mxu0 0.0
    %639 = vmatpush1.msra.mxu0 %v617
    %640 = vmatprep.subr.mxu0 0.0
    %641 = vmatpush1.msra.mxu0 %v616
    %642 = vmatprep.subr.mxu0 0.0
    %643 = vmatpush1.msra.mxu0 %v615
    %644 = vmatprep.subr.mxu0 0.0
    %645 = vmatpush1.msra.mxu0 %v614
    %646 = vmatprep.subr.mxu0 0.0
    %647 = vmatpush1.msra.mxu0 %v613
    %648 = vmatprep.subr.mxu0 0.0
    %649 = vmatpush1.msra.mxu0 %v612
    %650 = vmatprep.subr.mxu0 0.0
    %651 = vmatpush1.msra.mxu0 %v611
    %652 = vmatprep.subr.mxu0 0.0
    %653 = vmatpush1.msra.mxu0 %v610
    %654 = vmatprep.subr.mxu0 0.0
    %655 = vmatpush1.msra.mxu0 %v609
    %656 = vmatprep.subr.mxu0 0.0
    %657 = vmatpush1.msra.mxu0 %v608
    %658 = vmatprep.subr.mxu0 0.0
    %659 = vmatpush1.msra.mxu0 %v607
    %660 = vmatprep.subr.mxu0 0.0
    %661 = vmatpush2.msra.mxu0 0.0
    %662 = vmatprep.subr.mxu0 0.0
    %663 = vmatpush2.msra.mxu0 0.0
    %664 = vmatprep.subr.mxu0 0.0
    %665 = vmatpush2.msra.mxu0 0.0
    %666 = vmatprep.subr.mxu0 0.0
    %667 = vmatpush2.msra.mxu0 0.0
    %668 = vmatprep.subr.mxu0 0.0
    %669 = vmatpush2.msra.mxu0 0.0
    %670 = vmatprep.subr.mxu0 0.0
    %671 = vmatpush2.msra.mxu0 0.0
    %672 = vmatprep.subr.mxu0 0.0
    %673 = vmatpush2.msra.mxu0 0.0
    %674 = vmatprep.subr.mxu0 0.0
    %675 = vmatpush2.msra.mxu0 0.0
    %676 = vmatprep.subr.mxu0 0.0
    %677 = vmatpush2.msra.mxu0 0.0
    %678 = vmatprep.subr.mxu0 0.0
    %679 = vmatpush2.msra.mxu0 0.0
    %680 = vmatprep.subr.mxu0 0.0
    %681 = vmatpush2.msra.mxu0 0.0
    %682 = vmatprep.subr.mxu0 0.0
    %683 = vmatpush2.msra.mxu0 0.0
    %684 = vmatprep.subr.mxu0 0.0
    %685 = vmatpush2.msra.mxu0 0.0
    %686 = vmatprep.subr.mxu0 0.0
    %687 = vmatpush2.msra.mxu0 0.0
    %688 = vmatprep.subr.mxu0 0.0
    %689 = vmatpush2.msra.mxu0 0.0
    %690 = vmatprep.subr.mxu0 0.0
    %691 = vmatpush2.msra.mxu0 0.0
    %692 = vmatprep.mubr.f32.mxu0 0.0
    %693 = vmatmul.mubr.f32.gmra.mxu0 %v603
    %v694 = vpop.f32.mrf.mxu0
    %v695 = vadd.f32 %v627, %v694
    %v696 = vpop.f32.mrf.mxu0
    %697 = vdwg.mxu0
    %s698 = scalar_lea.vmem [#allocation5], 896
    %v699 = vld [vmem:[%s698] sm:$0xff]
    %v700 = vld [vmem:[%s698 + $0x8] sm:$0xff]
    %v701 = vld [vmem:[%s698 + $0x10] sm:$0xff]
    %v702 = vld [vmem:[%s698 + $0x18] sm:$0xff]
    %v703 = vld [vmem:[%s698 + $0x20] sm:$0xff]
    %v704 = vld [vmem:[%s698 + $0x28] sm:$0xff]
    %v705 = vld [vmem:[%s698 + $0x30] sm:$0xff]
    %v706 = vld [vmem:[%s698 + $0x38] sm:$0xff]
    %v707 = vld [vmem:[%s698 + $0x40] sm:$0xff]
    %v708 = vld [vmem:[%s698 + $0x48] sm:$0xff]
    %v709 = vld [vmem:[%s698 + $0x50] sm:$0xff]
    %v710 = vld [vmem:[%s698 + $0x58] sm:$0xff]
    %v711 = vld [vmem:[%s698 + $0x60] sm:$0xff]
    %v712 = vld [vmem:[%s698 + $0x68] sm:$0xff]
    %v713 = vld [vmem:[%s698 + $0x70] sm:$0xff]
    %v714 = vld [vmem:[%s698 + $0x78] sm:$0xff]
    %v715 = vld [vmem:[#allocation7 + $0x7] sm:$0x1]
    %v716 = vlaneseq
    %v717 = vshrl.u32 %v716, 7
    %v718 = vsub.s32 0, %v717
    %v719 = vrot.slane %v715, %v718
    %720 = vmatprep.subr.mxu0 0.0
    %721 = vmatpush1.msra.mxu0 %v714
    %722 = vmatprep.subr.mxu0 0.0
    %723 = vmatpush1.msra.mxu0 %v713
    %724 = vmatprep.subr.mxu0 0.0
    %725 = vmatpush1.msra.mxu0 %v712
    %726 = vmatprep.subr.mxu0 0.0
    %727 = vmatpush1.msra.mxu0 %v711
    %728 = vmatprep.subr.mxu0 0.0
    %729 = vmatpush1.msra.mxu0 %v710
    %730 = vmatprep.subr.mxu0 0.0
    %731 = vmatpush1.msra.mxu0 %v709
    %732 = vmatprep.subr.mxu0 0.0
    %733 = vmatpush1.msra.mxu0 %v708
    %734 = vmatprep.subr.mxu0 0.0
    %735 = vmatpush1.msra.mxu0 %v707
    %736 = vmatprep.subr.mxu0 0.0
    %737 = vmatpush1.msra.mxu0 %v706
    %738 = vmatprep.subr.mxu0 0.0
    %739 = vmatpush1.msra.mxu0 %v705
    %740 = vmatprep.subr.mxu0 0.0
    %741 = vmatpush1.msra.mxu0 %v704
    %742 = vmatprep.subr.mxu0 0.0
    %743 = vmatpush1.msra.mxu0 %v703
    %744 = vmatprep.subr.mxu0 0.0
    %745 = vmatpush1.msra.mxu0 %v702
    %746 = vmatprep.subr.mxu0 0.0
    %747 = vmatpush1.msra.mxu0 %v701
    %748 = vmatprep.subr.mxu0 0.0
    %749 = vmatpush1.msra.mxu0 %v700
    %750 = vmatprep.subr.mxu0 0.0
    %751 = vmatpush1.msra.mxu0 %v699
    %752 = vmatprep.subr.mxu0 0.0
    %753 = vmatpush2.msra.mxu0 0.0
    %754 = vmatprep.subr.mxu0 0.0
    %755 = vmatpush2.msra.mxu0 0.0
    %756 = vmatprep.subr.mxu0 0.0
    %757 = vmatpush2.msra.mxu0 0.0
    %758 = vmatprep.subr.mxu0 0.0
    %759 = vmatpush2.msra.mxu0 0.0
    %760 = vmatprep.subr.mxu0 0.0
    %761 = vmatpush2.msra.mxu0 0.0
    %762 = vmatprep.subr.mxu0 0.0
    %763 = vmatpush2.msra.mxu0 0.0
    %764 = vmatprep.subr.mxu0 0.0
    %765 = vmatpush2.msra.mxu0 0.0
    %766 = vmatprep.subr.mxu0 0.0
    %767 = vmatpush2.msra.mxu0 0.0
    %768 = vmatprep.subr.mxu0 0.0
    %769 = vmatpush2.msra.mxu0 0.0
    %770 = vmatprep.subr.mxu0 0.0
    %771 = vmatpush2.msra.mxu0 0.0
    %772 = vmatprep.subr.mxu0 0.0
    %773 = vmatpush2.msra.mxu0 0.0
    %774 = vmatprep.subr.mxu0 0.0
    %775 = vmatpush2.msra.mxu0 0.0
    %776 = vmatprep.subr.mxu0 0.0
    %777 = vmatpush2.msra.mxu0 0.0
    %778 = vmatprep.subr.mxu0 0.0
    %779 = vmatpush2.msra.mxu0 0.0
    %780 = vmatprep.subr.mxu0 0.0
    %781 = vmatpush2.msra.mxu0 0.0
    %782 = vmatprep.subr.mxu0 0.0
    %783 = vmatpush2.msra.mxu0 0.0
    %784 = vmatprep.mubr.f32.mxu0 0.0
    %785 = vmatmul.mubr.f32.gmra.mxu0 %v695
    %v786 = vpop.f32.mrf.mxu0
    %v787 = vadd.f32 %v719, %v786
    %v788 = vpop.f32.mrf.mxu0
    %789 = vdwg.mxu0
    %s790 = scalar_lea.vmem [#allocation5], 1024
    %v791 = vld [vmem:[%s790] sm:$0xff]
    %v792 = vld [vmem:[%s790 + $0x8] sm:$0xff]
    %v793 = vld [vmem:[%s790 + $0x10] sm:$0xff]
    %v794 = vld [vmem:[%s790 + $0x18] sm:$0xff]
    %v795 = vld [vmem:[%s790 + $0x20] sm:$0xff]
    %v796 = vld [vmem:[%s790 + $0x28] sm:$0xff]
    %v797 = vld [vmem:[%s790 + $0x30] sm:$0xff]
    %v798 = vld [vmem:[%s790 + $0x38] sm:$0xff]
    %v799 = vld [vmem:[%s790 + $0x40] sm:$0xff]
    %v800 = vld [vmem:[%s790 + $0x48] sm:$0xff]
    %v801 = vld [vmem:[%s790 + $0x50] sm:$0xff]
    %v802 = vld [vmem:[%s790 + $0x58] sm:$0xff]
    %v803 = vld [vmem:[%s790 + $0x60] sm:$0xff]
    %v804 = vld [vmem:[%s790 + $0x68] sm:$0xff]
    %v805 = vld [vmem:[%s790 + $0x70] sm:$0xff]
    %v806 = vld [vmem:[%s790 + $0x78] sm:$0xff]
    %v807 = vld [vmem:[#allocation7 + $0x8] sm:$0x1]
    %v808 = vlaneseq
    %v809 = vshrl.u32 %v808, 7
    %v810 = vsub.s32 0, %v809
    %v811 = vrot.slane %v807, %v810
    %812 = vmatprep.subr.mxu0 0.0
    %813 = vmatpush1.msra.mxu0 %v806
    %814 = vmatprep.subr.mxu0 0.0
    %815 = vmatpush1.msra.mxu0 %v805
    %816 = vmatprep.subr.mxu0 0.0
    %817 = vmatpush1.msra.mxu0 %v804
    %818 = vmatprep.subr.mxu0 0.0
    %819 = vmatpush1.msra.mxu0 %v803
    %820 = vmatprep.subr.mxu0 0.0
    %821 = vmatpush1.msra.mxu0 %v802
    %822 = vmatprep.subr.mxu0 0.0
    %823 = vmatpush1.msra.mxu0 %v801
    %824 = vmatprep.subr.mxu0 0.0
    %825 = vmatpush1.msra.mxu0 %v800
    %826 = vmatprep.subr.mxu0 0.0
    %827 = vmatpush1.msra.mxu0 %v799
    %828 = vmatprep.subr.mxu0 0.0
    %829 = vmatpush1.msra.mxu0 %v798
    %830 = vmatprep.subr.mxu0 0.0
    %831 = vmatpush1.msra.mxu0 %v797
    %832 = vmatprep.subr.mxu0 0.0
    %833 = vmatpush1.msra.mxu0 %v796
    %834 = vmatprep.subr.mxu0 0.0
    %835 = vmatpush1.msra.mxu0 %v795
    %836 = vmatprep.subr.mxu0 0.0
    %837 = vmatpush1.msra.mxu0 %v794
    %838 = vmatprep.subr.mxu0 0.0
    %839 = vmatpush1.msra.mxu0 %v793
    %840 = vmatprep.subr.mxu0 0.0
    %841 = vmatpush1.msra.mxu0 %v792
    %842 = vmatprep.subr.mxu0 0.0
    %843 = vmatpush1.msra.mxu0 %v791
    %844 = vmatprep.subr.mxu0 0.0
    %845 = vmatpush2.msra.mxu0 0.0
    %846 = vmatprep.subr.mxu0 0.0
    %847 = vmatpush2.msra.mxu0 0.0
    %848 = vmatprep.subr.mxu0 0.0
    %849 = vmatpush2.msra.mxu0 0.0
    %850 = vmatprep.subr.mxu0 0.0
    %851 = vmatpush2.msra.mxu0 0.0
    %852 = vmatprep.subr.mxu0 0.0
    %853 = vmatpush2.msra.mxu0 0.0
    %854 = vmatprep.subr.mxu0 0.0
    %855 = vmatpush2.msra.mxu0 0.0
    %856 = vmatprep.subr.mxu0 0.0
    %857 = vmatpush2.msra.mxu0 0.0
    %858 = vmatprep.subr.mxu0 0.0
    %859 = vmatpush2.msra.mxu0 0.0
    %860 = vmatprep.subr.mxu0 0.0
    %861 = vmatpush2.msra.mxu0 0.0
    %862 = vmatprep.subr.mxu0 0.0
    %863 = vmatpush2.msra.mxu0 0.0
    %864 = vmatprep.subr.mxu0 0.0
    %865 = vmatpush2.msra.mxu0 0.0
    %866 = vmatprep.subr.mxu0 0.0
    %867 = vmatpush2.msra.mxu0 0.0
    %868 = vmatprep.subr.mxu0 0.0
    %869 = vmatpush2.msra.mxu0 0.0
    %870 = vmatprep.subr.mxu0 0.0
    %871 = vmatpush2.msra.mxu0 0.0
    %872 = vmatprep.subr.mxu0 0.0
    %873 = vmatpush2.msra.mxu0 0.0
    %874 = vmatprep.subr.mxu0 0.0
    %875 = vmatpush2.msra.mxu0 0.0
    %876 = vmatprep.mubr.f32.mxu0 0.0
    %877 = vmatmul.mubr.f32.gmra.mxu0 %v787
    %v878 = vpop.f32.mrf.mxu0
    %v879 = vadd.f32 %v811, %v878
    %v880 = vpop.f32.mrf.mxu0
    %881 = vdwg.mxu0
    %s882 = scalar_lea.vmem [#allocation5], 1152
    %v883 = vld [vmem:[%s882] sm:$0xff]
    %v884 = vld [vmem:[%s882 + $0x8] sm:$0xff]
    %v885 = vld [vmem:[%s882 + $0x10] sm:$0xff]
    %v886 = vld [vmem:[%s882 + $0x18] sm:$0xff]
    %v887 = vld [vmem:[%s882 + $0x20] sm:$0xff]
    %v888 = vld [vmem:[%s882 + $0x28] sm:$0xff]
    %v889 = vld [vmem:[%s882 + $0x30] sm:$0xff]
    %v890 = vld [vmem:[%s882 + $0x38] sm:$0xff]
    %v891 = vld [vmem:[%s882 + $0x40] sm:$0xff]
    %v892 = vld [vmem:[%s882 + $0x48] sm:$0xff]
    %v893 = vld [vmem:[%s882 + $0x50] sm:$0xff]
    %v894 = vld [vmem:[%s882 + $0x58] sm:$0xff]
    %v895 = vld [vmem:[%s882 + $0x60] sm:$0xff]
    %v896 = vld [vmem:[%s882 + $0x68] sm:$0xff]
    %v897 = vld [vmem:[%s882 + $0x70] sm:$0xff]
    %v898 = vld [vmem:[%s882 + $0x78] sm:$0xff]
    %v899 = vld [vmem:[#allocation7 + $0x9] sm:$0x1]
    %v900 = vlaneseq
    %v901 = vshrl.u32 %v900, 7
    %v902 = vsub.s32 0, %v901
    %v903 = vrot.slane %v899, %v902
    %904 = vmatprep.subr.mxu0 0.0
    %905 = vmatpush1.msra.mxu0 %v898
    %906 = vmatprep.subr.mxu0 0.0
    %907 = vmatpush1.msra.mxu0 %v897
    %908 = vmatprep.subr.mxu0 0.0
    %909 = vmatpush1.msra.mxu0 %v896
    %910 = vmatprep.subr.mxu0 0.0
    %911 = vmatpush1.msra.mxu0 %v895
    %912 = vmatprep.subr.mxu0 0.0
    %913 = vmatpush1.msra.mxu0 %v894
    %914 = vmatprep.subr.mxu0 0.0
    %915 = vmatpush1.msra.mxu0 %v893
    %916 = vmatprep.subr.mxu0 0.0
    %917 = vmatpush1.msra.mxu0 %v892
    %918 = vmatprep.subr.mxu0 0.0
    %919 = vmatpush1.msra.mxu0 %v891
    %920 = vmatprep.subr.mxu0 0.0
    %921 = vmatpush1.msra.mxu0 %v890
    %922 = vmatprep.subr.mxu0 0.0
    %923 = vmatpush1.msra.mxu0 %v889
    %924 = vmatprep.subr.mxu0 0.0
    %925 = vmatpush1.msra.mxu0 %v888
    %926 = vmatprep.subr.mxu0 0.0
    %927 = vmatpush1.msra.mxu0 %v887
    %928 = vmatprep.subr.mxu0 0.0
    %929 = vmatpush1.msra.mxu0 %v886
    %930 = vmatprep.subr.mxu0 0.0
    %931 = vmatpush1.msra.mxu0 %v885
    %932 = vmatprep.subr.mxu0 0.0
    %933 = vmatpush1.msra.mxu0 %v884
    %934 = vmatprep.subr.mxu0 0.0
    %935 = vmatpush1.msra.mxu0 %v883
    %936 = vmatprep.subr.mxu0 0.0
    %937 = vmatpush2.msra.mxu0 0.0
    %938 = vmatprep.subr.mxu0 0.0
    %939 = vmatpush2.msra.mxu0 0.0
    %940 = vmatprep.subr.mxu0 0.0
    %941 = vmatpush2.msra.mxu0 0.0
    %942 = vmatprep.subr.mxu0 0.0
    %943 = vmatpush2.msra.mxu0 0.0
    %944 = vmatprep.subr.mxu0 0.0
    %945 = vmatpush2.msra.mxu0 0.0
    %946 = vmatprep.subr.mxu0 0.0
    %947 = vmatpush2.msra.mxu0 0.0
    %948 = vmatprep.subr.mxu0 0.0
    %949 = vmatpush2.msra.mxu0 0.0
    %950 = vmatprep.subr.mxu0 0.0
    %951 = vmatpush2.msra.mxu0 0.0
    %952 = vmatprep.subr.mxu0 0.0
    %953 = vmatpush2.msra.mxu0 0.0
    %954 = vmatprep.subr.mxu0 0.0
    %955 = vmatpush2.msra.mxu0 0.0
    %956 = vmatprep.subr.mxu0 0.0
    %957 = vmatpush2.msra.mxu0 0.0
    %958 = vmatprep.subr.mxu0 0.0
    %959 = vmatpush2.msra.mxu0 0.0
    %960 = vmatprep.subr.mxu0 0.0
    %961 = vmatpush2.msra.mxu0 0.0
    %962 = vmatprep.subr.mxu0 0.0
    %963 = vmatpush2.msra.mxu0 0.0
    %964 = vmatprep.subr.mxu0 0.0
    %965 = vmatpush2.msra.mxu0 0.0
    %966 = vmatprep.subr.mxu0 0.0
    %967 = vmatpush2.msra.mxu0 0.0
    %968 = vmatprep.mubr.f32.mxu0 0.0
    %969 = vmatmul.mubr.f32.gmra.mxu0 %v879
    %v970 = vpop.f32.mrf.mxu0
    %v971 = vadd.f32 %v903, %v970
    %v972 = vpop.f32.mrf.mxu0
    %973 = vdwg.mxu0
    %974 = vst [vmem:[#allocation8] sm:$0xff] %v971
    // Predicated region
    $region26: #{tpu_custom_call.1} parent=1 // pred_check
      _
    $region27: #{tpu_custom_call.1} parent=1 // pred_check_branch
      %976 = sbr.rel (0) target = $region29
    $region28: #{tpu_custom_call.1} parent=1 // pred_region
      %s978 = ssub.s32 128, 128
      %979 = vsyncadd [#allocation4], %s978
      %s981 = sshll.u32 [#allocation8], 4
      %s982 = int_to_ptr.vmem [resolvable:$true] %s981
      %984 = dma.vmem_to_hbm [thread:$0]  %s982, 128, %s3, [#allocation4]
    $region29: #{tpu_custom_call.1} parent=1 // pred_fallthru
      _
    // Predicated region
    $region30: #{tpu_custom_call.1} parent=1 // pred_check
      _
    $region31: #{tpu_custom_call.1} parent=1 // pred_check_branch
      %986 = sbr.rel (0) target = $region33
    $region32: #{tpu_custom_call.1} parent=1 // pred_region
      %987 = dma.done [#allocation4], 128
    $region33: #{tpu_custom_call.1} parent=1 // pred_fallthru
      _
    %988 = vsyncpa [#allocation3], 1
    %989 = vsyncpa [#allocation6], 1
    %990 = vsyncpa [#allocation4], 1

</llo_original>
